<compile_context>
chip_gen: v5e
topology: v5e:2x2
jax: 0.10.0
libtpu: 0.0.40
codegen_flags: <defaults>
</compile_context>

<pallas_src>
import functools

import jax
import jax.numpy as jnp
from jax.experimental import pallas as pl
from jax.experimental.pallas import tpu as pltpu

_LANES = 128
_SUBLANES = 8


def _round_up(x: int, m: int) -> int:
    return ((x + m - 1) // m) * m


def _downsample_kernel(x_ref, o_ref, *, s, inv_s):
    # x_ref: (tn * s, td) native dtype; o_ref: (tn, td)
    tn, _ = o_ref.shape
    # Unrolled accumulate over the s window offsets using strided sublane slices.
    # Only a (tn, td) f32 accumulator is live (no s-times f32 intermediate, no
    # tile-boundary-crossing reshape).
    acc = x_ref[pl.ds(0, tn, stride=s), :].astype(jnp.float32)
    for k in range(1, s):
        acc = acc + x_ref[pl.ds(k, tn, stride=s), :].astype(jnp.float32)
    o_ref[...] = (acc * inv_s).astype(o_ref.dtype)


def _per_buffer_budget_bytes() -> int:
    """Per-input-buffer tile budget, sized for the tightest generation present."""
    try:
        vmem = int(pltpu.get_tpu_info().vmem_capacity_bytes)
    except Exception:
        vmem = 64 << 20  # be conservative if the query is unavailable
    if vmem >= (128 << 20):   # v5e / v6e: 128 MiB VMEM -> larger tiles are free wins
        return 12 << 20
    return 8 << 20            # v7x: 64 MiB physical -> keep 2 buffers well inside it


def _pick_feature_tile(d: int, s: int, itemsize: int, budget: int) -> int:
    """Prefer full feature width (one contiguous DMA / widest stores); else split D
    into the largest multiple-of-128 divisor whose 8-row input tile fits budget."""
    if _SUBLANES * s * d * itemsize <= budget:
        return d
    if d % _LANES == 0:
        cap = (budget // (_SUBLANES * s * itemsize)) // _LANES * _LANES
        td = max(_LANES, cap)
        while td > _LANES and d % td != 0:
            td -= _LANES
        return td
    # Ragged, huge D that doesn't fit an 8-row full-width tile.
    # TODO(synk): split the window axis (partial-sum grid dim) for this corner case.
    return d


def _pick_row_tile(rows_out: int, s: int, td: int, itemsize: int, budget: int) -> int:
    """Largest multiple-of-8 row tile whose input tile fits the budget.  Prefers an
    exact divisor of rows_out (no edge waste); otherwise the cdiv grid masks the
    ragged last block."""
    cap = budget // max(1, s * td * itemsize)
    cap = max(_SUBLANES, (cap // _SUBLANES) * _SUBLANES)
    limit = min(cap, _round_up(rows_out, _SUBLANES))
    best_div = 0
    tn = _SUBLANES
    while tn <= limit:
        if rows_out % tn == 0:
            best_div = tn
        tn += _SUBLANES
    if best_div >= max(_SUBLANES, limit // 2):
        return best_div
    return limit


def naive_downsample(x: jax.Array, shorten_factor: int) -> jax.Array:
    """Mean-pool x (B, L, D) -> (B, L // shorten_factor, D)."""
    b, l, d = x.shape
    s = int(shorten_factor)
    assert l % s == 0, "sequence length must be divisible by shorten_factor"
    n = l // s
    if s == 1:
        return x

    rows_out = b * n
    itemsize = jnp.dtype(x.dtype).itemsize

    budget = _per_buffer_budget_bytes()
    td = _pick_feature_tile(d, s, itemsize, budget)
    tn = _pick_row_tile(rows_out, s, td, itemsize, budget)
    rows_in_tile = tn * s

    grid = (pl.cdiv(rows_out, tn), max(1, d // td))

    # Derive the VMEM limit from the actual working set instead of hardcoding:
    # 2x double-buffered input tiles + 2x output tiles + f32 accumulator + slack.
    in_tile_bytes = rows_in_tile * td * itemsize
    out_tile_bytes = tn * td * itemsize
    acc_bytes = tn * td * 4
    vmem_limit = 2 * in_tile_bytes + 2 * out_tile_bytes + acc_bytes + (4 << 20)
    vmem_limit = int(min(max(vmem_limit, 16 << 20), 48 << 20))

    x2 = x.reshape(rows_out * s, d)   # contiguous view: free

    kernel = functools.partial(_downsample_kernel, s=s, inv_s=1.0 / s)

    y2 = pl.pallas_call(
        kernel,
        out_shape=jax.ShapeDtypeStruct((rows_out, d), x.dtype),
        grid_spec=pltpu.PrefetchScalarGridSpec(
            num_scalar_prefetch=0,
            grid=grid,
            in_specs=[pl.BlockSpec((rows_in_tile, td), lambda j, k: (j, k))],
            out_specs=pl.BlockSpec((tn, td), lambda j, k: (j, k)),
        ),
        compiler_params=pltpu.CompilerParams(
            dimension_semantics=("parallel", "parallel"),
            vmem_limit_bytes=vmem_limit,
        ),
        cost_estimate=pl.CostEstimate(
            flops=b * l * d,                                     # (s-1) adds + 1 mul per out elem
            transcendentals=0,
            bytes_accessed=(b * l * d + b * n * d) * itemsize,   # read x + write y
        ),
    )(x2)

    return y2.reshape(b, n, d)


if __name__ == "__main__":
    # Small deterministic example: batch=2, seq=16, hidden=32, shorten_factor=4
    key = jax.random.PRNGKey(0)
    B, L, D = 2, 16, 32
    shorten_factor = 4

    x = jax.random.normal(key, (B, L, D), dtype=jnp.float32)

    y = naive_downsample(x, shorten_factor)
    y = jax.block_until_ready(y)

    # Reference: einops reduce 'b (n s) d -> b n d', 'mean'
    y_ref = x.reshape(B, L // shorten_factor, shorten_factor, D).mean(axis=2)
    assert y.shape == (B, L // shorten_factor, D)
    assert jnp.allclose(y, y_ref, atol=1e-6, rtol=1e-6)

    print("KERNEL_OK")
</pallas_src>

<mosaic_0001>
module attributes {stable_mosaic.version = 11 : i64} {
  func.func @_downsample_kernel(%arg0: i32, %arg1: i32, %arg2: memref<32x32xf32, #tpu.memory_space<vmem>>, %arg3: memref<8x32xf32, #tpu.memory_space<vmem>>) attributes {dimension_semantics = [#tpu.dimension_semantics<parallel>, #tpu.dimension_semantics<parallel>], iteration_bounds = array<i64: 1, 1>, scalar_prefetch = 0 : i64, scratch_operands = 0 : i64, tpu.core_type = #tpu.core_type<tc>, window_params = [{transform_indices = @transform_0, window_bounds = array<i64: 32, 32>}, {transform_indices = @transform_1, window_bounds = array<i64: 8, 32>}]} {
    %c0 = arith.constant 0 : index
    %c0_0 = arith.constant 0 : index
    %0 = tpu.strided_load %arg2[%c0, %c0_0] {strides = array<i32: 4, 1>} : memref<32x32xf32, #tpu.memory_space<vmem>>, vector<8x32xf32>
    %c1 = arith.constant 1 : index
    %c0_1 = arith.constant 0 : index
    %1 = tpu.strided_load %arg2[%c1, %c0_1] {strides = array<i32: 4, 1>} : memref<32x32xf32, #tpu.memory_space<vmem>>, vector<8x32xf32>
    %2 = arith.addf %0, %1 : vector<8x32xf32>
    %c2 = arith.constant 2 : index
    %c0_2 = arith.constant 0 : index
    %3 = tpu.strided_load %arg2[%c2, %c0_2] {strides = array<i32: 4, 1>} : memref<32x32xf32, #tpu.memory_space<vmem>>, vector<8x32xf32>
    %4 = arith.addf %2, %3 : vector<8x32xf32>
    %c3 = arith.constant 3 : index
    %c0_3 = arith.constant 0 : index
    %5 = tpu.strided_load %arg2[%c3, %c0_3] {strides = array<i32: 4, 1>} : memref<32x32xf32, #tpu.memory_space<vmem>>, vector<8x32xf32>
    %6 = arith.addf %4, %5 : vector<8x32xf32>
    %cst = arith.constant 2.500000e-01 : f32
    %7 = vector.broadcast %cst : f32 to vector<8x32xf32>
    %8 = arith.mulf %6, %7 : vector<8x32xf32>
    %c0_4 = arith.constant 0 : index
    %c0_5 = arith.constant 0 : index
    %9 = vector.load %arg3[%c0_4, %c0_5] : memref<8x32xf32, #tpu.memory_space<vmem>>, vector<8x32xf32>
    tpu.vector_store %arg3[%c0_4, %c0_5], %8 {strides = array<i32>} : memref<8x32xf32, #tpu.memory_space<vmem>>, vector<8x32xf32>,
    return
  }
  func.func @transform_0(%arg0: i32, %arg1: i32) -> (i32, i32) {
    %c0_i32 = arith.constant 0 : i32
    return %arg0, %arg1 : i32, i32
  }
  func.func @transform_1(%arg0: i32, %arg1: i32) -> (i32, i32) {
    %c0_i32 = arith.constant 0 : i32
    return %arg0, %arg1 : i32, i32
  }
}

</mosaic_0001>

<llo_original>
// kernel: tpu_custom_call.1
$region0: #{tpu_custom_call.1}
  #allocation0 [shape = 'u32[]', space=smem, size = 0x4, offset = 0x4, fixed_abs, tag = 'smem constant byte address 0x4 - core index']
  #allocation1 [shape = 'u32[72,128]{1,0:T(1,128)}', space=vmem, size = 0x9000, scoped, tag = 'internal scratch']
  %s0 = inlined_call_operand.hbm [shape: f32[32,32], index: 0, kind: input, shape index: {}]
  %s1 = inlined_call_operand.hbm [shape: f32[8,32], index: 1, kind: output, shape index: {}]
  %s2 = sld [smem:[#allocation0]]
  $region18: #{tpu_custom_call.1} parent=0
    _
  %s4 = ssub.s32 1, %s2
  %s5 = scalar_select 0, %s4, %s2
  $region1: #{tpu_custom_call.1} parent=0
    #allocation2 [shape = 'u8[16384]{0}', space=vmem, size = 0x4000, scoped, tag = 'input window, operand 0, single buffered']
    #allocation3 [shape = 's32[1]{0}', space=sflag, size = 0x4, scoped, tag = 'scoped memory for tpu_custom_call.1']
    #allocation4 [shape = 's32[1]{0}', space=sflag, size = 0x4, scoped, tag = 'scoped memory for tpu_custom_call.1']
    #allocation5 [shape = 'u8[4096]{0}', space=vmem, size = 0x1000, scoped, tag = 'output window, operand 0, single buffered']
    %6 = vsyncpa [#allocation3], 0
    %7 = vsyncpa [#allocation4], 0
    // Predicated region
    $region2: #{tpu_custom_call.1} parent=1 // pred_check
      _
    $region3: #{tpu_custom_call.1} parent=1 // pred_check_branch
      %9 = sbr.rel (0) target = $region5
    $region4: #{tpu_custom_call.1} parent=1 // pred_region
      %11 = vsyncadd [#allocation3], 0
      %s12 = sshll.u32 %s0, 4
      %s13 = int_to_ptr.hbm [resolvable:$true] %s12
      %s14 = sshll.u32 [#allocation2], 4
      %s15 = int_to_ptr.vmem [resolvable:$true] %s14
      %20 = dma.hbm_to_vmem [thread:$0]  %s13, 512, %s15, [#allocation3], 128, 128, 8
    $region5: #{tpu_custom_call.1} parent=1 // pred_fallthru
      _
    // Predicated region
    $region6: #{tpu_custom_call.1} parent=1 // pred_check
      _
    $region7: #{tpu_custom_call.1} parent=1 // pred_check_branch
      %22 = sbr.rel (0) target = $region9
    $region8: #{tpu_custom_call.1} parent=1 // pred_region
      %24 = dma.done [#allocation3], 512
    $region9: #{tpu_custom_call.1} parent=1 // pred_fallthru
      _
    %v25 = vld [vmem:[#allocation2] ss:$4 sm:$0xff]
    %s26 = scalar_lea.vmem [#allocation2], 1
    %v27 = vld [vmem:[%s26] ss:$4 sm:$0xff]
    %v28 = vadd.f32 %v25, %v27
    %s29 = scalar_lea.vmem [#allocation2], 2
    %v30 = vld [vmem:[%s29] ss:$4 sm:$0xff]
    %v31 = vadd.f32 %v28, %v30
    %s32 = scalar_lea.vmem [#allocation2], 3
    %v33 = vld [vmem:[%s32] ss:$4 sm:$0xff]
    %v34 = vadd.f32 %v31, %v33
    %v35 = vmul.f32 %v34, 0.25
    %vm36 = vcmask 261120
    %37 = vst.msk [vmem:[#allocation5] sm:$0xff] %vm36, %v35
    // Predicated region
    $region10: #{tpu_custom_call.1} parent=1 // pred_check
      _
    $region11: #{tpu_custom_call.1} parent=1 // pred_check_branch
      %39 = sbr.rel (0) target = $region13
    $region12: #{tpu_custom_call.1} parent=1 // pred_region
      %41 = vsyncadd [#allocation4], 0
      %s43 = sshll.u32 [#allocation5], 4
      %s44 = int_to_ptr.vmem [resolvable:$true] %s43
      %s45 = sshll.u32 %s1, 4
      %s46 = int_to_ptr.hbm [resolvable:$true] %s45
      %48 = dma.vmem_to_hbm [thread:$0]  %s44, 128, %s46, [#allocation4]
    $region13: #{tpu_custom_call.1} parent=1 // pred_fallthru
      _
    // Predicated region
    $region14: #{tpu_custom_call.1} parent=1 // pred_check
      _
    $region15: #{tpu_custom_call.1} parent=1 // pred_check_branch
      %50 = sbr.rel (0) target = $region17
    $region16: #{tpu_custom_call.1} parent=1 // pred_region
      %52 = dma.done [#allocation4], 128
    $region17: #{tpu_custom_call.1} parent=1 // pred_fallthru
      _
    %53 = vsyncpa [#allocation3], 1
    %54 = vsyncpa [#allocation4], 1

</llo_original>
